<compile_context>
chip_gen: v7x
topology: tpu7x:2x2x1
jax: 0.10.0
libtpu: 0.0.40
codegen_flags: <defaults>
</compile_context>

<pallas_src>
import functools

import jax
import jax.numpy as jnp
from jax import lax
from jax.experimental import pallas as pl
from jax.experimental.pallas import tpu as pltpu


def _mlp_kernel(x_ref, w1_ref, b1_ref, w2_ref, b2_ref, w3_ref, b3_ref, o_ref):
    # x tile is native [batch_tile, in]. Contract feature dims of W1 and x on the
    # MXU -> h is [H1, batch_tile]: batch lands on lanes, so the bias-add and
    # ReLU below are lane-dense VPU ops.
    x = x_ref[...]
    h = lax.dot_general(w1_ref[...], x, (((1,), (1,)), ((), ())),
                        preferred_element_type=jnp.float32)
    h = jnp.maximum(h + b1_ref[...], 0.0)          # b1 is [H1, 1] -> lane broadcast
    h = jnp.dot(w2_ref[...], h, preferred_element_type=jnp.float32)
    h = jnp.maximum(h + b2_ref[...], 0.0)          # b2 is [H2, 1]
    # Final layer: contract h's feature dim (0) with W3's in-dim (1) so the
    # result comes out directly as [batch_tile, out] (no transpose outside).
    out = lax.dot_general(h, w3_ref[...], (((0,), (1,)), ((), ())),
                          preferred_element_type=jnp.float32)
    o_ref[...] = (out + b3_ref[...]).astype(o_ref.dtype)   # b3 is [1, out]


def _pick_batch_tile(batch):
    """Multiple of 8. Aims for >=2 balanced grid steps so v7x's two TensorCores
    both get work (a single extra step costs ~0.35us on single-TC chips), while
    keeping per-step tiles large (step-overhead / small-DMA bound regime)."""
    rup8 = lambda n: -(-n // 8) * 8
    if batch <= 256:
        return max(8, rup8(batch))            # too small to split usefully
    return min(2048, rup8(-(-batch // 2)))    # 2+ steps, capped at 2048 rows


@functools.partial(jax.jit, static_argnames=("batch_tile",))
def simple_model_forward(x, params, batch_tile=None):
    """x: [B, input_size] float32 (PyTorch-native layout).
    params: (w1, b1, w2, b2, w3, b3) with weights PyTorch-native [out, in] and
    biases 1-D [out]. Returns [B, output_size]."""
    w1, b1, w2, b2, w3, b3 = params
    B, in_size = x.shape
    h1, h2, out_size = w1.shape[0], w2.shape[0], w3.shape[0]

    if batch_tile is None:
        batch_tile = _pick_batch_tile(B)
    batch_tile = max(8, -(-batch_tile // 8) * 8)   # sublane-aligned
    n_tiles = pl.cdiv(B, batch_tile)               # last block may be partial

    # Tiny param reshapes (a few hundred bytes, fused by XLA): biases oriented
    # so the in-kernel broadcasts are direct.
    b1c = b1.reshape(h1, 1)
    b2c = b2.reshape(h2, 1)
    b3c = b3.reshape(1, out_size)

    # Whole-array blocks with constant index_maps: weights/biases stay
    # VMEM-resident across all grid steps (no per-step weight DMA).
    full = lambda a: pl.BlockSpec(a.shape, lambda i: (0,) * a.ndim)

    return pl.pallas_call(
        _mlp_kernel,
        out_shape=jax.ShapeDtypeStruct((B, out_size), x.dtype),
        grid_spec=pltpu.PrefetchScalarGridSpec(
            num_scalar_prefetch=0,
            grid=(n_tiles,),
            in_specs=[
                pl.BlockSpec((batch_tile, in_size), lambda i: (i, 0)),
                full(w1), full(b1c), full(w2), full(b2c), full(w3), full(b3c),
            ],
            out_specs=pl.BlockSpec((batch_tile, out_size), lambda i: (i, 0)),
        ),
        compiler_params=pltpu.CompilerParams(
            dimension_semantics=("parallel",),   # shard batch tiles across v7x TCs
        ),
    )(x, w1, b1c, w2, b2c, w3, b3c)


def init_params(key, input_size, hidden_size, output_size):
    """Deterministic init mimicking nn.Linear default (uniform +-1/sqrt(fan_in)).
    Weights are PyTorch-native [out, in]; biases are 1-D [out]."""
    dims = [input_size] + list(hidden_size) + [output_size]
    params = []
    for fan_in, fan_out in zip(dims[:-1], dims[1:]):
        key, kw, kb = jax.random.split(key, 3)
        bound = 1.0 / jnp.sqrt(jnp.float32(fan_in))
        w = jax.random.uniform(kw, (fan_out, fan_in), jnp.float32, -bound, bound)
        b = jax.random.uniform(kb, (fan_out,), jnp.float32, -bound, bound)
        params.extend([w, b])
    return tuple(params)


def reference_forward(x, params):
    w1, b1, w2, b2, w3, b3 = params
    h = jnp.maximum(x @ w1.T + b1, 0.0)
    h = jnp.maximum(h @ w2.T + b2, 0.0)
    return h @ w3.T + b3


if __name__ == "__main__":
    # Shapes consistent with the module: 2 hidden layers, small feature widths.
    input_size, hidden_size, output_size = 16, [32, 32], 8
    batch = 512            # default tile chooser -> 2 tiles of 256 (both v7x TCs busy)

    key = jax.random.PRNGKey(0)
    key, kx = jax.random.split(key)
    x = jax.random.normal(kx, (batch, input_size), jnp.float32)
    params = init_params(key, input_size, hidden_size, output_size)

    out = jax.block_until_ready(simple_model_forward(x, params))
    ref = reference_forward(x, params)
    assert out.shape == (batch, output_size)
    assert jnp.allclose(out, ref, atol=1e-4, rtol=1e-4)

    # Ragged-batch path: B not a multiple of the tile -> Pallas partial last
    # block (no host-side pad or slice; OOB rows masked on store).
    xr = jax.random.normal(kx, (300, input_size), jnp.float32)
    out_r = jax.block_until_ready(simple_model_forward(xr, params))
    assert out_r.shape == (300, output_size)
    assert jnp.allclose(out_r, reference_forward(xr, params), atol=1e-4, rtol=1e-4)

    print("KERNEL_OK")
</pallas_src>

<mosaic_0001>
module attributes {stable_mosaic.version = 11 : i64} {
  func.func @_mlp_kernel(%arg0: i32, %arg1: memref<256x16xf32, #tpu.memory_space<vmem>>, %arg2: memref<32x16xf32, #tpu.memory_space<vmem>>, %arg3: memref<32x1xf32, #tpu.memory_space<vmem>>, %arg4: memref<32x32xf32, #tpu.memory_space<vmem>>, %arg5: memref<32x1xf32, #tpu.memory_space<vmem>>, %arg6: memref<8x32xf32, #tpu.memory_space<vmem>>, %arg7: memref<1x8xf32, #tpu.memory_space<vmem>>, %arg8: memref<256x8xf32, #tpu.memory_space<vmem>>) attributes {dimension_semantics = [#tpu.dimension_semantics<parallel>], iteration_bounds = array<i64: 2>, scalar_prefetch = 0 : i64, scratch_operands = 0 : i64, tpu.core_type = #tpu.core_type<tc>, window_params = [{transform_indices = @transform_0, window_bounds = array<i64: 256, 16>}, {pipeline_mode = #tpu.pipeline_mode<synchronous>, transform_indices = @transform_1, window_bounds = array<i64: 32, 16>}, {pipeline_mode = #tpu.pipeline_mode<synchronous>, transform_indices = @transform_2, window_bounds = array<i64: 32, 1>}, {pipeline_mode = #tpu.pipeline_mode<synchronous>, transform_indices = @transform_3, window_bounds = array<i64: 32, 32>}, {pipeline_mode = #tpu.pipeline_mode<synchronous>, transform_indices = @transform_4, window_bounds = array<i64: 32, 1>}, {pipeline_mode = #tpu.pipeline_mode<synchronous>, transform_indices = @transform_5, window_bounds = array<i64: 8, 32>}, {pipeline_mode = #tpu.pipeline_mode<synchronous>, transform_indices = @transform_6, window_bounds = array<i64: 1, 8>}, {transform_indices = @transform_7, window_bounds = array<i64: 256, 8>}]} {
    %c0 = arith.constant 0 : index
    %c0_0 = arith.constant 0 : index
    %0 = vector.load %arg1[%c0, %c0_0] : memref<256x16xf32, #tpu.memory_space<vmem>>, vector<256x16xf32>
    %c0_1 = arith.constant 0 : index
    %c0_2 = arith.constant 0 : index
    %1 = vector.load %arg2[%c0_1, %c0_2] : memref<32x16xf32, #tpu.memory_space<vmem>>, vector<32x16xf32>
    %cst = arith.constant dense<0.000000e+00> : vector<32x256xf32>
    %2 = tpu.matmul %1, %0, %cst {dimension_numbers = #tpu.dot_dimension_numbers<[1], [1], [0], [0], [0, 0, 1, 0], [], []>} : vector<32x16xf32>, vector<256x16xf32>, vector<32x256xf32> -> vector<32x256xf32>
    %c0_3 = arith.constant 0 : index
    %c0_4 = arith.constant 0 : index
    %3 = vector.load %arg3[%c0_3, %c0_4] : memref<32x1xf32, #tpu.memory_space<vmem>>, vector<32x1xf32>
    %4 = vector.broadcast %3 : vector<32x1xf32> to vector<32x256xf32>
    %5 = arith.addf %2, %4 : vector<32x256xf32>
    %cst_5 = arith.constant 0.000000e+00 : f32
    %6 = vector.broadcast %cst_5 : f32 to vector<32x256xf32>
    %7 = arith.maximumf %5, %6 : vector<32x256xf32>
    %c0_6 = arith.constant 0 : index
    %c0_7 = arith.constant 0 : index
    %8 = vector.load %arg4[%c0_6, %c0_7] : memref<32x32xf32, #tpu.memory_space<vmem>>, vector<32x32xf32>
    %cst_8 = arith.constant dense<0.000000e+00> : vector<32x256xf32>
    %9 = tpu.matmul %8, %7, %cst_8 {dimension_numbers = #tpu.dot_dimension_numbers<[1], [0], [0], [1], [0, 0, 1, 1], [], []>} : vector<32x32xf32>, vector<32x256xf32>, vector<32x256xf32> -> vector<32x256xf32>
    %c0_9 = arith.constant 0 : index
    %c0_10 = arith.constant 0 : index
    %10 = vector.load %arg5[%c0_9, %c0_10] : memref<32x1xf32, #tpu.memory_space<vmem>>, vector<32x1xf32>
    %11 = vector.broadcast %10 : vector<32x1xf32> to vector<32x256xf32>
    %12 = arith.addf %9, %11 : vector<32x256xf32>
    %cst_11 = arith.constant 0.000000e+00 : f32
    %13 = vector.broadcast %cst_11 : f32 to vector<32x256xf32>
    %14 = arith.maximumf %12, %13 : vector<32x256xf32>
    %c0_12 = arith.constant 0 : index
    %c0_13 = arith.constant 0 : index
    %15 = vector.load %arg6[%c0_12, %c0_13] : memref<8x32xf32, #tpu.memory_space<vmem>>, vector<8x32xf32>
    %cst_14 = arith.constant dense<0.000000e+00> : vector<256x8xf32>
    %16 = tpu.matmul %14, %15, %cst_14 {dimension_numbers = #tpu.dot_dimension_numbers<[0], [1], [1], [0], [0, 1, 1, 0], [], []>} : vector<32x256xf32>, vector<8x32xf32>, vector<256x8xf32> -> vector<256x8xf32>
    %c0_15 = arith.constant 0 : index
    %c0_16 = arith.constant 0 : index
    %17 = vector.load %arg7[%c0_15, %c0_16] : memref<1x8xf32, #tpu.memory_space<vmem>>, vector<1x8xf32>
    %18 = vector.broadcast %17 : vector<1x8xf32> to vector<256x8xf32>
    %19 = arith.addf %16, %18 : vector<256x8xf32>
    %c0_17 = arith.constant 0 : index
    %c0_18 = arith.constant 0 : index
    %20 = vector.load %arg8[%c0_17, %c0_18] : memref<256x8xf32, #tpu.memory_space<vmem>>, vector<256x8xf32>
    tpu.vector_store %arg8[%c0_17, %c0_18], %19 {strides = array<i32>} : memref<256x8xf32, #tpu.memory_space<vmem>>, vector<256x8xf32>,
    return
  }
  func.func @transform_0(%arg0: i32) -> (i32, i32) {
    %c0_i32 = arith.constant 0 : i32
    %c0_i32_0 = arith.constant 0 : i32
    return %arg0, %c0_i32 : i32, i32
  }
  func.func @transform_1(%arg0: i32) -> (i32, i32) {
    %c0_i32 = arith.constant 0 : i32
    %c0_i32_0 = arith.constant 0 : i32
    %c0_i32_1 = arith.constant 0 : i32
    return %c0_i32, %c0_i32_0 : i32, i32
  }
  func.func @transform_2(%arg0: i32) -> (i32, i32) {
    %c0_i32 = arith.constant 0 : i32
    %c0_i32_0 = arith.constant 0 : i32
    %c0_i32_1 = arith.constant 0 : i32
    return %c0_i32, %c0_i32_0 : i32, i32
  }
  func.func @transform_3(%arg0: i32) -> (i32, i32) {
    %c0_i32 = arith.constant 0 : i32
    %c0_i32_0 = arith.constant 0 : i32
    %c0_i32_1 = arith.constant 0 : i32
    return %c0_i32, %c0_i32_0 : i32, i32
  }
  func.func @transform_4(%arg0: i32) -> (i32, i32) {
    %c0_i32 = arith.constant 0 : i32
    %c0_i32_0 = arith.constant 0 : i32
    %c0_i32_1 = arith.constant 0 : i32
    return %c0_i32, %c0_i32_0 : i32, i32
  }
  func.func @transform_5(%arg0: i32) -> (i32, i32) {
    %c0_i32 = arith.constant 0 : i32
    %c0_i32_0 = arith.constant 0 : i32
    %c0_i32_1 = arith.constant 0 : i32
    return %c0_i32, %c0_i32_0 : i32, i32
  }
  func.func @transform_6(%arg0: i32) -> (i32, i32) {
    %c0_i32 = arith.constant 0 : i32
    %c0_i32_0 = arith.constant 0 : i32
    %c0_i32_1 = arith.constant 0 : i32
    return %c0_i32, %c0_i32_0 : i32, i32
  }
  func.func @transform_7(%arg0: i32) -> (i32, i32) {
    %c0_i32 = arith.constant 0 : i32
    %c0_i32_0 = arith.constant 0 : i32
    return %arg0, %c0_i32 : i32, i32
  }
}

</mosaic_0001>

<llo_original>
// kernel: simple_model_forward.1
$region0: #{simple_model_forward.1}
  #allocation0 [shape = 'u32[]', space=smem, size = 0x4, offset = 0x4, fixed_abs, tag = 'smem constant byte address 0x4 - core index']
  #allocation1 [shape = 'u32[144,128]{1,0:T(1,128)}', space=vmem, size = 0x12000, scoped, tag = 'internal scratch']
  %s0 = inlined_call_operand.vmem [shape: f32[512,16], index: 0, kind: input, shape index: {}]
  %s1 = inlined_call_operand.vmem [shape: f32[32,16], index: 1, kind: input, shape index: {}]
  %s2 = inlined_call_operand.vmem [shape: f32[32,1], index: 2, kind: input, shape index: {}]
  %s3 = inlined_call_operand.vmem [shape: f32[32,32], index: 3, kind: input, shape index: {}]
  %s4 = inlined_call_operand.vmem [shape: f32[32,1], index: 4, kind: input, shape index: {}]
  %s5 = inlined_call_operand.vmem [shape: f32[8,32], index: 5, kind: input, shape index: {}]
  %s6 = inlined_call_operand.vmem [shape: f32[1,8], index: 6, kind: input, shape index: {}]
  %s7 = inlined_call_operand.vmem [shape: f32[512,8], index: 7, kind: output, shape index: {}]
  %s8 = sld [smem:[#allocation0]]
  $region61: #{simple_model_forward.1} parent=0
    _
  %s10 = ssub.s32 1, %s8
  %s11 = scalar_select 0, %s10, %s8
  loop: start=0, step=1, limit=4
  $region2: #{simple_model_forward.1} parent=0 // loop_pre_header
    _
  $region3: #{simple_model_forward.1} parent=0 // loop_header
    %s13 = sphi 0, %s17
    %p14 = scmp.ge.s32.totalorder %s13, 4
    %s23 = sphi 0, %s25
    %s26 = sphi 0, %s23
    %s27 = sphi 0, %s26
    %s43 = sphi 0, %s27
    %s47 = sphi 0, %s47
    %s49 = sphi 0, %s47
    %s50 = sphi 0, %s49
    %s64 = sphi 0, %s50
    %s68 = sphi 0, %s68
    %s70 = sphi 0, %s68
    %s71 = sphi 0, %s70
    %s85 = sphi 0, %s71
    %s89 = sphi 0, %s89
    %s91 = sphi 0, %s89
    %s92 = sphi 0, %s91
    %s106 = sphi 0, %s92
    %s110 = sphi 0, %s110
    %s112 = sphi 0, %s110
    %s113 = sphi 0, %s112
    %s127 = sphi 0, %s113
    %s131 = sphi 0, %s131
    %s133 = sphi 0, %s131
    %s134 = sphi 0, %s133
    %s148 = sphi 0, %s134
    %s152 = sphi 0, %s152
    %s154 = sphi 0, %s152
    %s155 = sphi 0, %s154
    %s169 = sphi 0, %s155
    %s175 = sphi 0, %s177
    %s178 = sphi 0, %s175
    %s179 = sphi 0, %s178
    %s195 = sphi 0, %s179
  $region4: #{simple_model_forward.1} parent=0 // loop_header_branch
    %16 = sbr.rel (%p14) target = $region8
  $region5: #{simple_model_forward.1} parent=0 // loop_body
    %s18 = ssub.s32 %s13, 1
    %s19 = ssub.s32 %s13, 2
    %s20 = sadd.s32 %s13, 1
    %s21 = ssub.s32 %s13, %s20
    %p22 = scmp.eq.s32.totalorder %s21, 0
    %s24 = sadd.s32 %s23, 1
    %s25 = scalar_select %p22, %s23, %s24
    %p28 = pneg %p22
    %p29 = scmp.eq.s32.totalorder %s13, 1
    %p30 = por %p28, %p29
    %p31 = scmp.ne.s32.totalorder %s23, %s26
    %p32 = scmp.eq.s32.totalorder %s13, 0
    %p33 = por %p31, %p32
    %p34 = scmp.ne.s32.totalorder %s23, %s26
    %p35 = scmp.eq.s32.totalorder %s18, 1
    %p36 = por %p34, %p35
    %p37 = scmp.ne.s32.totalorder %s26, %s27
    %p38 = scmp.eq.s32.totalorder %s18, 0
    %p39 = por %p37, %p38
    %p40 = scmp.ne.s32.totalorder %s26, %s27
    %p41 = scmp.eq.s32.totalorder %s19, 1
    %p42 = por %p40, %p41
    %p44 = scmp.ne.s32.totalorder %s27, %s43
    %p45 = scmp.eq.s32.totalorder %s19, 0
    %p46 = por %p44, %p45
    %s48 = sadd.s32 %s47, 1
    %p51 = scmp.eq.s32.totalorder %s13, 1
    %p52 = scmp.ne.s32.totalorder %s47, %s49
    %p53 = scmp.eq.s32.totalorder %s13, 0
    %p54 = por %p52, %p53
    %p55 = scmp.ne.s32.totalorder %s47, %s49
    %p56 = scmp.eq.s32.totalorder %s18, 1
    %p57 = por %p55, %p56
    %p58 = scmp.ne.s32.totalorder %s49, %s50
    %p59 = scmp.eq.s32.totalorder %s18, 0
    %p60 = por %p58, %p59
    %p61 = scmp.ne.s32.totalorder %s49, %s50
    %p62 = scmp.eq.s32.totalorder %s19, 1
    %p63 = por %p61, %p62
    %p65 = scmp.ne.s32.totalorder %s50, %s64
    %p66 = scmp.eq.s32.totalorder %s19, 0
    %p67 = por %p65, %p66
    %s69 = sadd.s32 %s68, 1
    %p72 = scmp.eq.s32.totalorder %s13, 1
    %p73 = scmp.ne.s32.totalorder %s68, %s70
    %p74 = scmp.eq.s32.totalorder %s13, 0
    %p75 = por %p73, %p74
    %p76 = scmp.ne.s32.totalorder %s68, %s70
    %p77 = scmp.eq.s32.totalorder %s18, 1
    %p78 = por %p76, %p77
    %p79 = scmp.ne.s32.totalorder %s70, %s71
    %p80 = scmp.eq.s32.totalorder %s18, 0
    %p81 = por %p79, %p80
    %p82 = scmp.ne.s32.totalorder %s70, %s71
    %p83 = scmp.eq.s32.totalorder %s19, 1
    %p84 = por %p82, %p83
    %p86 = scmp.ne.s32.totalorder %s71, %s85
    %p87 = scmp.eq.s32.totalorder %s19, 0
    %p88 = por %p86, %p87
    %s90 = sadd.s32 %s89, 1
    %p93 = scmp.eq.s32.totalorder %s13, 1
    %p94 = scmp.ne.s32.totalorder %s89, %s91
    %p95 = scmp.eq.s32.totalorder %s13, 0
    %p96 = por %p94, %p95
    %p97 = scmp.ne.s32.totalorder %s89, %s91
    %p98 = scmp.eq.s32.totalorder %s18, 1
    %p99 = por %p97, %p98
    %p100 = scmp.ne.s32.totalorder %s91, %s92
    %p101 = scmp.eq.s32.totalorder %s18, 0
    %p102 = por %p100, %p101
    %p103 = scmp.ne.s32.totalorder %s91, %s92
    %p104 = scmp.eq.s32.totalorder %s19, 1
    %p105 = por %p103, %p104
    %p107 = scmp.ne.s32.totalorder %s92, %s106
    %p108 = scmp.eq.s32.totalorder %s19, 0
    %p109 = por %p107, %p108
    %s111 = sadd.s32 %s110, 1
    %p114 = scmp.eq.s32.totalorder %s13, 1
    %p115 = scmp.ne.s32.totalorder %s110, %s112
    %p116 = scmp.eq.s32.totalorder %s13, 0
    %p117 = por %p115, %p116
    %p118 = scmp.ne.s32.totalorder %s110, %s112
    %p119 = scmp.eq.s32.totalorder %s18, 1
    %p120 = por %p118, %p119
    %p121 = scmp.ne.s32.totalorder %s112, %s113
    %p122 = scmp.eq.s32.totalorder %s18, 0
    %p123 = por %p121, %p122
    %p124 = scmp.ne.s32.totalorder %s112, %s113
    %p125 = scmp.eq.s32.totalorder %s19, 1
    %p126 = por %p124, %p125
    %p128 = scmp.ne.s32.totalorder %s113, %s127
    %p129 = scmp.eq.s32.totalorder %s19, 0
    %p130 = por %p128, %p129
    %s132 = sadd.s32 %s131, 1
    %p135 = scmp.eq.s32.totalorder %s13, 1
    %p136 = scmp.ne.s32.totalorder %s131, %s133
    %p137 = scmp.eq.s32.totalorder %s13, 0
    %p138 = por %p136, %p137
    %p139 = scmp.ne.s32.totalorder %s131, %s133
    %p140 = scmp.eq.s32.totalorder %s18, 1
    %p141 = por %p139, %p140
    %p142 = scmp.ne.s32.totalorder %s133, %s134
    %p143 = scmp.eq.s32.totalorder %s18, 0
    %p144 = por %p142, %p143
    %p145 = scmp.ne.s32.totalorder %s133, %s134
    %p146 = scmp.eq.s32.totalorder %s19, 1
    %p147 = por %p145, %p146
    %p149 = scmp.ne.s32.totalorder %s134, %s148
    %p150 = scmp.eq.s32.totalorder %s19, 0
    %p151 = por %p149, %p150
    %s153 = sadd.s32 %s152, 1
    %p156 = scmp.eq.s32.totalorder %s13, 1
    %p157 = scmp.ne.s32.totalorder %s152, %s154
    %p158 = scmp.eq.s32.totalorder %s13, 0
    %p159 = por %p157, %p158
    %p160 = scmp.ne.s32.totalorder %s152, %s154
    %p161 = scmp.eq.s32.totalorder %s18, 1
    %p162 = por %p160, %p161
    %p163 = scmp.ne.s32.totalorder %s154, %s155
    %p164 = scmp.eq.s32.totalorder %s18, 0
    %p165 = por %p163, %p164
    %p166 = scmp.ne.s32.totalorder %s154, %s155
    %p167 = scmp.eq.s32.totalorder %s19, 1
    %p168 = por %p166, %p167
    %p170 = scmp.ne.s32.totalorder %s155, %s169
    %p171 = scmp.eq.s32.totalorder %s19, 0
    %p172 = por %p170, %p171
    %s173 = ssub.s32 %s13, %s20
    %p174 = scmp.eq.s32.totalorder %s173, 0
    %s176 = sadd.s32 %s175, 1
    %s177 = scalar_select %p174, %s175, %s176
    %p180 = pneg %p174
    %p181 = scmp.eq.s32.totalorder %s13, 1
    %p182 = por %p180, %p181
    %p183 = scmp.ne.s32.totalorder %s175, %s178
    %p184 = scmp.eq.s32.totalorder %s13, 0
    %p185 = por %p183, %p184
    %p186 = scmp.ne.s32.totalorder %s175, %s178
    %p187 = scmp.eq.s32.totalorder %s18, 1
    %p188 = por %p186, %p187
    %p189 = scmp.ne.s32.totalorder %s178, %s179
    %p190 = scmp.eq.s32.totalorder %s18, 0
    %p191 = por %p189, %p190
    %p192 = scmp.ne.s32.totalorder %s178, %s179
    %p193 = scmp.eq.s32.totalorder %s19, 1
    %p194 = por %p192, %p193
    %p196 = scmp.ne.s32.totalorder %s179, %s195
    %p197 = scmp.eq.s32.totalorder %s19, 0
    %p198 = por %p196, %p197
    %p199 = scmp.le.s32.totalorder 1, %s13
    %p200 = scmp.lt.s32.totalorder %s13, 3
    %p201 = pnand %p199, %p200
    %p202 = pneg %p201
    // Predicated region
    $region9: #{simple_model_forward.1} parent=5 // pred_check
      _
    $region10: #{simple_model_forward.1} parent=5 // pred_check_branch
      %204 = sbr.rel (%p201) target = $region12
    $region11: #{simple_model_forward.1} parent=5 // pred_region
      %s205 = ssub.s32 %s13, 1
      // Predicated region
      $region13: #{simple_model_forward.1} parent=11 // pred_check
        %p206 = pneg %p60
      $region14: #{simple_model_forward.1} parent=11 // pred_check_branch
        %208 = sbr.rel (%p206) target = $region16
      $region15: #{simple_model_forward.1} parent=11 // pred_region
        _
      $region16: #{simple_model_forward.1} parent=11 // pred_fallthru
        _
      // Predicated region
      $region17: #{simple_model_forward.1} parent=11 // pred_check
        %p209 = pneg %p81
      $region18: #{simple_model_forward.1} parent=11 // pred_check_branch
        %211 = sbr.rel (%p209) target = $region20
      $region19: #{simple_model_forward.1} parent=11 // pred_region
        _
      $region20: #{simple_model_forward.1} parent=11 // pred_fallthru
        _
      // Predicated region
      $region21: #{simple_model_forward.1} parent=11 // pred_check
        %p212 = pneg %p102
      $region22: #{simple_model_forward.1} parent=11 // pred_check_branch
        %214 = sbr.rel (%p212) target = $region24
      $region23: #{simple_model_forward.1} parent=11 // pred_region
        _
      $region24: #{simple_model_forward.1} parent=11 // pred_fallthru
        _
      // Predicated region
      $region25: #{simple_model_forward.1} parent=11 // pred_check
        %p215 = pneg %p123
      $region26: #{simple_model_forward.1} parent=11 // pred_check_branch
        %217 = sbr.rel (%p215) target = $region28
      $region27: #{simple_model_forward.1} parent=11 // pred_region
        _
      $region28: #{simple_model_forward.1} parent=11 // pred_fallthru
        _
      // Predicated region
      $region29: #{simple_model_forward.1} parent=11 // pred_check
        %p218 = pneg %p144
      $region30: #{simple_model_forward.1} parent=11 // pred_check_branch
        %220 = sbr.rel (%p218) target = $region32
      $region31: #{simple_model_forward.1} parent=11 // pred_region
        _
      $region32: #{simple_model_forward.1} parent=11 // pred_fallthru
        _
      // Predicated region
      $region33: #{simple_model_forward.1} parent=11 // pred_check
        %p221 = pneg %p165
      $region34: #{simple_model_forward.1} parent=11 // pred_check_branch
        %223 = sbr.rel (%p221) target = $region36
      $region35: #{simple_model_forward.1} parent=11 // pred_region
        _
      $region36: #{simple_model_forward.1} parent=11 // pred_fallthru
        _
    $region12: #{simple_model_forward.1} parent=5 // pred_fallthru
      _
    %p224 = scmp.lt.s32.totalorder %s13, 2
    // Predicated region
    $region37: #{simple_model_forward.1} parent=5 // pred_check
      %p225 = pneg %p224
    $region38: #{simple_model_forward.1} parent=5 // pred_check_branch
      %227 = sbr.rel (%p225) target = $region40
    $region39: #{simple_model_forward.1} parent=5 // pred_region
      // Predicated region
      $region41: #{simple_model_forward.1} parent=39 // pred_check
        %p228 = pneg %p33
      $region42: #{simple_model_forward.1} parent=39 // pred_check_branch
        %230 = sbr.rel (%p228) target = $region44
      $region43: #{simple_model_forward.1} parent=39 // pred_region
        %s231 = smul.u32 32, %s13
        %p232 = scmp.lt.s32.totalorder %s231, 63
        %s233 = scalar_select %p232, %s231, 63
        %s234 = smul.addr %s233, 8
        %s235 = scalar_lea.vmem %s0, %s234
        %s236 = smul.u32 32, %s13
      $region44: #{simple_model_forward.1} parent=39 // pred_fallthru
        _
    $region40: #{simple_model_forward.1} parent=5 // pred_fallthru
      _
    %p237 = scmp.le.s32.totalorder 1, %s13
    %p238 = scmp.lt.s32.totalorder %s13, 3
    %p239 = pnand %p237, %p238
    %p240 = pneg %p239
    // Predicated region
    $region45: #{simple_model_forward.1} parent=5 // pred_check
      _
    $region46: #{simple_model_forward.1} parent=5 // pred_check_branch
      %242 = sbr.rel (%p239) target = $region48
    $region47: #{simple_model_forward.1} parent=5 // pred_region
      %s243 = ssub.s32 %s13, 1
      %s244 = smul.u32 32, %s18
      %p245 = scmp.lt.s32.totalorder %s244, 63
      %s246 = scalar_select %p245, %s244, 63
      %s247 = smul.addr %s246, 8
      %s248 = scalar_lea.vmem %s0, %s247
      %p249 = pneg %p39
      %p250 = pneg %p36
      %p251 = pneg %p60
      %p252 = pneg %p57
      %p253 = pneg %p81
      %p254 = pneg %p78
      %p255 = pneg %p102
      %p256 = pneg %p99
      %p257 = pneg %p123
      %p258 = pneg %p120
      %p259 = pneg %p144
      %p260 = pneg %p141
      %p261 = pneg %p165
      %p262 = pneg %p162
      %p263 = pneg %p191
      %p264 = pneg %p188
      %s265 = smul.u32 32, %s18
      %p266 = scmp.lt.s32.totalorder %s265, 63
      %s267 = scalar_select %p266, %s265, 63
      %s268 = smul.addr %s267, 8
      %s269 = scalar_lea.vmem %s7, %s268
      %s270 = smul.u32 32, %s18
      %p271 = scmp.lt.s32.totalorder %s270, 63
      %s272 = scalar_select %p271, %s270, 63
      %s273 = smul.addr %s272, 8
      %s274 = scalar_lea.vmem %s0, %s273
      %s275 = smul.u32 32, %s18
      %s276 = smul.u32 32, %s18
      %p277 = scmp.lt.s32.totalorder %s276, 63
      %s278 = scalar_select %p277, %s276, 63
      %s279 = smul.addr %s278, 8
      %s280 = scalar_lea.vmem %s7, %s279
      %s281 = smul.u32 32, %s18
      %v282 = vld [vmem:[%s274] sm:$0xff]
      %v283 = vld [vmem:[%s274 + $0x8] sm:$0xff]
      %v284 = vld [vmem:[%s274 + $0x10] sm:$0xff]
      %v285 = vld [vmem:[%s274 + $0x18] sm:$0xff]
      %v286 = vld [vmem:[%s274 + $0x20] sm:$0xff]
      %v287 = vld [vmem:[%s274 + $0x28] sm:$0xff]
      %v288 = vld [vmem:[%s274 + $0x30] sm:$0xff]
      %v289 = vld [vmem:[%s274 + $0x38] sm:$0xff]
      %v290 = vld [vmem:[%s274 + $0x40] sm:$0xff]
      %v291 = vld [vmem:[%s274 + $0x48] sm:$0xff]
      %v292 = vld [vmem:[%s274 + $0x50] sm:$0xff]
      %v293 = vld [vmem:[%s274 + $0x58] sm:$0xff]
      %v294 = vld [vmem:[%s274 + $0x60] sm:$0xff]
      %v295 = vld [vmem:[%s274 + $0x68] sm:$0xff]
      %v296 = vld [vmem:[%s274 + $0x70] sm:$0xff]
      %v297 = vld [vmem:[%s274 + $0x78] sm:$0xff]
      %v298 = vld [vmem:[%s274 + $0x80] sm:$0xff]
      %v299 = vld [vmem:[%s274 + $0x88] sm:$0xff]
      %v300 = vld [vmem:[%s274 + $0x90] sm:$0xff]
      %v301 = vld [vmem:[%s274 + $0x98] sm:$0xff]
      %v302 = vld [vmem:[%s274 + $0xa0] sm:$0xff]
      %v303 = vld [vmem:[%s274 + $0xa8] sm:$0xff]
      %v304 = vld [vmem:[%s274 + $0xb0] sm:$0xff]
      %v305 = vld [vmem:[%s274 + $0xb8] sm:$0xff]
      %v306 = vld [vmem:[%s274 + $0xc0] sm:$0xff]
      %v307 = vld [vmem:[%s274 + $0xc8] sm:$0xff]
      %v308 = vld [vmem:[%s274 + $0xd0] sm:$0xff]
      %v309 = vld [vmem:[%s274 + $0xd8] sm:$0xff]
      %v310 = vld [vmem:[%s274 + $0xe0] sm:$0xff]
      %v311 = vld [vmem:[%s274 + $0xe8] sm:$0xff]
      %v312 = vld [vmem:[%s274 + $0xf0] sm:$0xff]
      %v313 = vld [vmem:[%s274 + $0xf8] sm:$0xff]
      %v314 = vld [vmem:[%s1] sm:$0xff]
      %v315 = vld [vmem:[%s1 + $0x8] sm:$0xff]
      %v316 = vld [vmem:[%s1 + $0x10] sm:$0xff]
      %v317 = vld [vmem:[%s1 + $0x18] sm:$0xff]
      %v318 = vld [vmem:[%s2] sm:$0xff]
      %v319 = vld [vmem:[%s2 + $0x8] sm:$0xff]
      %v320 = vld [vmem:[%s2 + $0x10] sm:$0xff]
      %v321 = vld [vmem:[%s2 + $0x18] sm:$0xff]
      %323 = vset.pattern.permute.xlu0 0
      %324 = vperm.xlu0 %323, %v318
      %v325 = vpop.permute.xlu0 %324
      %328 = vset.pattern.permute.xlu0 0
      %329 = vperm.xlu0 %328, %v319
      %v330 = vpop.permute.xlu0 %329
      %333 = vset.pattern.permute.xlu0 0
      %334 = vperm.xlu0 %333, %v320
      %v335 = vpop.permute.xlu0 %334
      %338 = vset.pattern.permute.xlu0 0
      %339 = vperm.xlu0 %338, %v321
      %v340 = vpop.permute.xlu0 %339
      %vm342 = vcmask 130048
      %v344 = vsel %vm342, %v314, 0
      %v347 = vsel %vm342, %v315, 0
      %v350 = vsel %vm342, %v316, 0
      %v353 = vsel %vm342, %v317, 0
      %v356 = vsel %vm342, %v282, 0
      %v359 = vsel %vm342, %v283, 0
      %v362 = vsel %vm342, %v284, 0
      %v365 = vsel %vm342, %v285, 0
      %v368 = vsel %vm342, %v286, 0
      %v371 = vsel %vm342, %v287, 0
      %v374 = vsel %vm342, %v288, 0
      %v377 = vsel %vm342, %v289, 0
      %v380 = vsel %vm342, %v290, 0
      %v383 = vsel %vm342, %v291, 0
      %v386 = vsel %vm342, %v292, 0
      %v389 = vsel %vm342, %v293, 0
      %v392 = vsel %vm342, %v294, 0
      %v395 = vsel %vm342, %v295, 0
      %v398 = vsel %vm342, %v296, 0
      %v401 = vsel %vm342, %v297, 0
      %v404 = vsel %vm342, %v298, 0
      %v407 = vsel %vm342, %v299, 0
      %v410 = vsel %vm342, %v300, 0
      %v413 = vsel %vm342, %v301, 0
      %v416 = vsel %vm342, %v302, 0
      %v419 = vsel %vm342, %v303, 0
      %v422 = vsel %vm342, %v304, 0
      %v425 = vsel %vm342, %v305, 0
      %v428 = vsel %vm342, %v306, 0
      %v431 = vsel %vm342, %v307, 0
      %v434 = vsel %vm342, %v308, 0
      %v437 = vsel %vm342, %v309, 0
      %v440 = vsel %vm342, %v310, 0
      %v443 = vsel %vm342, %v311, 0
      %v446 = vsel %vm342, %v312, 0
      %v449 = vsel %vm342, %v313, 0
      %451 = vmatprep.subr.mxu0 0.0
      %452 = vmatpush1.xpose.msra.mxu0 %v356
      %453 = vmatprep.subr.mxu0 0.0
      %454 = vmatpush1.xpose.msra.mxu0 %v359
      %455 = vmatprep.subr.mxu0 0.0
      %456 = vmatpush1.xpose.msra.mxu0 %v362
      %457 = vmatprep.subr.mxu0 0.0
      %458 = vmatpush1.xpose.msra.mxu0 %v365
      %459 = vmatprep.subr.mxu0 0.0
      %460 = vmatpush1.xpose.msra.mxu0 %v368
      %461 = vmatprep.subr.mxu0 0.0
      %462 = vmatpush1.xpose.msra.mxu0 %v371
      %463 = vmatprep.subr.mxu0 0.0
      %464 = vmatpush1.xpose.msra.mxu0 %v374
      %465 = vmatprep.subr.mxu0 0.0
      %466 = vmatpush1.xpose.msra.mxu0 %v377
      %467 = vmatprep.subr.mxu0 0.0
      %468 = vmatpush1.xpose.msra.mxu0 %v380
      %469 = vmatprep.subr.mxu0 0.0
      %470 = vmatpush1.xpose.msra.mxu0 %v383
      %471 = vmatprep.subr.mxu0 0.0
      %472 = vmatpush1.xpose.msra.mxu0 %v386
      %473 = vmatprep.subr.mxu0 0.0
      %474 = vmatpush1.xpose.msra.mxu0 %v389
      %475 = vmatprep.subr.mxu0 0.0
      %476 = vmatpush1.xpose.msra.mxu0 %v392
      %477 = vmatprep.subr.mxu0 0.0
      %478 = vmatpush1.xpose.msra.mxu0 %v395
      %479 = vmatprep.subr.mxu0 0.0
      %480 = vmatpush1.xpose.msra.mxu0 %v398
      %481 = vmatprep.subr.mxu0 0.0
      %482 = vmatpush1.xpose.msra.mxu0 %v401
      %483 = vmatprep.subr.mxu0 0.0
      %484 = vmatpush1.xpose.msra.mxu0 %v404
      %485 = vmatprep.subr.mxu0 0.0
      %486 = vmatpush1.xpose.msra.mxu0 %v407
      %487 = vmatprep.subr.mxu0 0.0
      %488 = vmatpush1.xpose.msra.mxu0 %v410
      %489 = vmatprep.subr.mxu0 0.0
      %490 = vmatpush1.xpose.msra.mxu0 %v413
      %491 = vmatprep.subr.mxu0 0.0
      %492 = vmatpush1.xpose.msra.mxu0 %v416
      %493 = vmatprep.subr.mxu0 0.0
      %494 = vmatpush1.xpose.msra.mxu0 %v419
      %495 = vmatprep.subr.mxu0 0.0
      %496 = vmatpush1.xpose.msra.mxu0 %v422
      %497 = vmatprep.subr.mxu0 0.0
      %498 = vmatpush1.xpose.msra.mxu0 %v425
      %499 = vmatprep.subr.mxu0 0.0
      %500 = vmatpush1.xpose.msra.mxu0 %v428
      %501 = vmatprep.subr.mxu0 0.0
      %502 = vmatpush1.xpose.msra.mxu0 %v431
      %503 = vmatprep.subr.mxu0 0.0
      %504 = vmatpush1.xpose.msra.mxu0 %v434
      %505 = vmatprep.subr.mxu0 0.0
      %506 = vmatpush1.xpose.msra.mxu0 %v437
      %507 = vmatprep.subr.mxu0 0.0
      %508 = vmatpush1.xpose.msra.mxu0 %v440
      %509 = vmatprep.subr.mxu0 0.0
      %510 = vmatpush1.xpose.msra.mxu0 %v443
      %511 = vmatprep.subr.mxu0 0.0
      %512 = vmatpush1.xpose.msra.mxu0 %v446
      %513 = vmatprep.subr.mxu0 0.0
      %514 = vmatpush1.xpose.msra.mxu0 %v449
      %515 = vmatprep.mubr.f32.mxu0 0.0
      %516 = vmatmul.mubr.f32.gmra.mrb[0].mxu0 %v344
      %v517 = vpop.f32.mrb[0].mxu0
      %v518 = vadd.f32 %v325, %v517
      %v519 = vpop.f32.mrb[0].mxu0
      %v520 = vadd.f32 %v325, %v519
      %521 = vmatprep.mubr.f32.mxu0 0.0
      %522 = vmatmul.mubr.f32.gmra.mrb[0].mxu0 %v347
      %v523 = vpop.f32.mrb[0].mxu0
      %v524 = vadd.f32 %v330, %v523
      %v525 = vpop.f32.mrb[0].mxu0
      %v526 = vadd.f32 %v330, %v525
      %527 = vmatprep.mubr.f32.mxu0 0.0
      %528 = vmatmul.mubr.f32.gmra.mrb[0].mxu0 %v350
      %v529 = vpop.f32.mrb[0].mxu0
      %v530 = vadd.f32 %v335, %v529
      %v531 = vpop.f32.mrb[0].mxu0
      %v532 = vadd.f32 %v335, %v531
      %533 = vmatprep.mubr.f32.mxu0 0.0
      %534 = vmatmul.mubr.f32.gmra.mrb[0].mxu0 %v353
      %v535 = vpop.f32.mrb[0].mxu0
      %v536 = vadd.f32 %v340, %v535
      %v537 = vpop.f32.mrb[0].mxu0
      %v538 = vadd.f32 %v340, %v537
      %539 = vdwg.mxu0
      %v540 = vmax.f32 %v518, 0.0
      %v541 = vmax.f32 %v520, 0.0
      %v542 = vmax.f32 %v524, 0.0
      %v543 = vmax.f32 %v526, 0.0
      %v544 = vmax.f32 %v530, 0.0
      %v545 = vmax.f32 %v532, 0.0
      %v546 = vmax.f32 %v536, 0.0
      %v547 = vmax.f32 %v538, 0.0
      %v548 = vld [vmem:[%s3] sm:$0xff]
      %v549 = vld [vmem:[%s3 + $0x8] sm:$0xff]
      %v550 = vld [vmem:[%s3 + $0x10] sm:$0xff]
      %v551 = vld [vmem:[%s3 + $0x18] sm:$0xff]
      %v552 = vld [vmem:[%s4] sm:$0xff]
      %v553 = vld [vmem:[%s4 + $0x8] sm:$0xff]
      %v554 = vld [vmem:[%s4 + $0x10] sm:$0xff]
      %v555 = vld [vmem:[%s4 + $0x18] sm:$0xff]
      %557 = vset.pattern.permute.xlu0 0
      %558 = vperm.xlu0 %557, %v552
      %v559 = vpop.permute.xlu0 %558
      %562 = vset.pattern.permute.xlu0 0
      %563 = vperm.xlu0 %562, %v553
      %v564 = vpop.permute.xlu0 %563
      %567 = vset.pattern.permute.xlu0 0
      %568 = vperm.xlu0 %567, %v554
      %v569 = vpop.permute.xlu0 %568
      %572 = vset.pattern.permute.xlu0 0
      %573 = vperm.xlu0 %572, %v555
      %v574 = vpop.permute.xlu0 %573
      %vm576 = vcmask 261120
      %v578 = vsel %vm576, %v548, 0
      %v581 = vsel %vm576, %v549, 0
      %v584 = vsel %vm576, %v550, 0
      %v587 = vsel %vm576, %v551, 0
      %589 = vmatprep.subr.mxu0 %v541
      %590 = vmatpush1.msra.mxu0 %v540
      %591 = vmatprep.subr.mxu0 %v543
      %592 = vmatpush1.msra.mxu0 %v542
      %593 = vmatprep.subr.mxu0 %v545
      %594 = vmatpush1.msra.mxu0 %v544
      %595 = vmatprep.subr.mxu0 %v547
      %596 = vmatpush1.msra.mxu0 %v546
      %597 = vmatprep.subr.mxu0 0.0
      %598 = vmatpush1.msra.mxu0 0.0
      %599 = vmatprep.subr.mxu0 0.0
      %600 = vmatpush1.msra.mxu0 0.0
      %601 = vmatprep.subr.mxu0 0.0
      %602 = vmatpush1.msra.mxu0 0.0
      %603 = vmatprep.subr.mxu0 0.0
      %604 = vmatpush1.msra.mxu0 0.0
      %605 = vmatprep.subr.mxu0 0.0
      %606 = vmatpush1.msra.mxu0 0.0
      %607 = vmatprep.subr.mxu0 0.0
      %608 = vmatpush1.msra.mxu0 0.0
      %609 = vmatprep.subr.mxu0 0.0
      %610 = vmatpush1.msra.mxu0 0.0
      %611 = vmatprep.subr.mxu0 0.0
      %612 = vmatpush1.msra.mxu0 0.0
      %613 = vmatprep.subr.mxu0 0.0
      %614 = vmatpush1.msra.mxu0 0.0
      %615 = vmatprep.subr.mxu0 0.0
      %616 = vmatpush1.msra.mxu0 0.0
      %617 = vmatprep.subr.mxu0 0.0
      %618 = vmatpush1.msra.mxu0 0.0
      %619 = vmatprep.subr.mxu0 0.0
      %620 = vmatpush1.msra.mxu0 0.0
      %621 = vmatprep.subr.mxu0 0.0
      %622 = vmatpush1.msra.mxu0 0.0
      %623 = vmatprep.subr.mxu0 0.0
      %624 = vmatpush1.msra.mxu0 0.0
      %625 = vmatprep.subr.mxu0 0.0
      %626 = vmatpush1.msra.mxu0 0.0
      %627 = vmatprep.subr.mxu0 0.0
      %628 = vmatpush1.msra.mxu0 0.0
      %629 = vmatprep.subr.mxu0 0.0
      %630 = vmatpush1.msra.mxu0 0.0
      %631 = vmatprep.subr.mxu0 0.0
      %632 = vmatpush1.msra.mxu0 0.0
      %633 = vmatprep.subr.mxu0 0.0
      %634 = vmatpush1.msra.mxu0 0.0
      %635 = vmatprep.subr.mxu0 0.0
      %636 = vmatpush1.msra.mxu0 0.0
      %637 = vmatprep.subr.mxu0 0.0
      %638 = vmatpush1.msra.mxu0 0.0
      %639 = vmatprep.subr.mxu0 0.0
      %640 = vmatpush1.msra.mxu0 0.0
      %641 = vmatprep.subr.mxu0 0.0
      %642 = vmatpush1.msra.mxu0 0.0
      %643 = vmatprep.subr.mxu0 0.0
      %644 = vmatpush1.msra.mxu0 0.0
      %645 = vmatprep.subr.mxu0 0.0
      %646 = vmatpush1.msra.mxu0 0.0
      %647 = vmatprep.subr.mxu0 0.0
      %648 = vmatpush1.msra.mxu0 0.0
      %649 = vmatprep.subr.mxu0 0.0
      %650 = vmatpush1.msra.mxu0 0.0
      %651 = vmatprep.subr.mxu0 0.0
      %652 = vmatpush1.msra.mxu0 0.0
      %653 = vmatprep.mubr.f32.mxu0 0.0
      %654 = vmatmul.mubr.f32.gmra.mrb[0].mxu0 %v578
      %v655 = vpop.f32.mrb[0].mxu0
      %v656 = vadd.f32 %v559, %v655
      %v657 = vpop.f32.mrb[0].mxu0
      %v658 = vadd.f32 %v559, %v657
      %659 = vmatprep.mubr.f32.mxu0 0.0
      %660 = vmatmul.mubr.f32.gmra.mrb[0].mxu0 %v581
      %v661 = vpop.f32.mrb[0].mxu0
      %v662 = vadd.f32 %v564, %v661
      %v663 = vpop.f32.mrb[0].mxu0
      %v664 = vadd.f32 %v564, %v663
      %665 = vmatprep.mubr.f32.mxu0 0.0
      %666 = vmatmul.mubr.f32.gmra.mrb[0].mxu0 %v584
      %v667 = vpop.f32.mrb[0].mxu0
      %v668 = vadd.f32 %v569, %v667
      %v669 = vpop.f32.mrb[0].mxu0
      %v670 = vadd.f32 %v569, %v669
      %671 = vmatprep.mubr.f32.mxu0 0.0
      %672 = vmatmul.mubr.f32.gmra.mrb[0].mxu0 %v587
      %v673 = vpop.f32.mrb[0].mxu0
      %v674 = vadd.f32 %v574, %v673
      %v675 = vpop.f32.mrb[0].mxu0
      %v676 = vadd.f32 %v574, %v675
      %677 = vdwg.mxu0
      %v678 = vmax.f32 %v656, 0.0
      %v679 = vmax.f32 %v658, 0.0
      %v680 = vmax.f32 %v662, 0.0
      %v681 = vmax.f32 %v664, 0.0
      %v682 = vmax.f32 %v668, 0.0
      %v683 = vmax.f32 %v670, 0.0
      %v684 = vmax.f32 %v674, 0.0
      %v685 = vmax.f32 %v676, 0.0
      %v686 = vld [vmem:[%s5] sm:$0xff]
      %v687 = vld [vmem:[%s6] sm:$0x1]
      %v689 = vlaneseq
      %v690 = vshrl.u32 %v689, 7
      %v691 = vsub.s32 0, %v690
      %v692 = vrot.slane %v687, %v691
      %694 = vxpose.xlu0.b32.start [1/16] %v678, 128
      %695 = vxpose.xlu0.b32.cont [2/16] %v680, 128
      %696 = vxpose.xlu0.b32.cont [3/16] %v682, 128
      %697 = vxpose.xlu0.b32.cont [4/16] %v684, 128
      %698 = vxpose.xlu0.b32.cont [5/16] 0.0, 128
      %699 = vxpose.xlu0.b32.cont [6/16] 0.0, 128
      %700 = vxpose.xlu0.b32.cont [7/16] 0.0, 128
      %701 = vxpose.xlu0.b32.cont [8/16] 0.0, 128
      %702 = vxpose.xlu0.b32.cont [9/16] 0.0, 128
      %703 = vxpose.xlu0.b32.cont [10/16] 0.0, 128
      %704 = vxpose.xlu0.b32.cont [11/16] 0.0, 128
      %705 = vxpose.xlu0.b32.cont [12/16] 0.0, 128
      %706 = vxpose.xlu0.b32.cont [13/16] 0.0, 128
      %707 = vxpose.xlu0.b32.cont [14/16] 0.0, 128
      %708 = vxpose.xlu0.b32.cont [15/16] 0.0, 128
      %709 = vxpose.xlu0.b32.end [16/16] 0.0, 128
      %v710 = vpop.trf.xlu0
      %v711 = vpop.trf.xlu0
      %v712 = vpop.trf.xlu0
      %v713 = vpop.trf.xlu0
      %v714 = vpop.trf.xlu0
      %v715 = vpop.trf.xlu0
      %v716 = vpop.trf.xlu0
      %v717 = vpop.trf.xlu0
      %v718 = vpop.trf.xlu0
      %v719 = vpop.trf.xlu0
      %v720 = vpop.trf.xlu0
      %v721 = vpop.trf.xlu0
      %v722 = vpop.trf.xlu0
      %v723 = vpop.trf.xlu0
      %v724 = vpop.trf.xlu0
      %v725 = vpop.trf.xlu0
      %726 = vxpose.xlu0.b32.start [1/16] %v679, 128
      %727 = vxpose.xlu0.b32.cont [2/16] %v681, 128
      %728 = vxpose.xlu0.b32.cont [3/16] %v683, 128
      %729 = vxpose.xlu0.b32.cont [4/16] %v685, 128
      %730 = vxpose.xlu0.b32.cont [5/16] 0.0, 128
      %731 = vxpose.xlu0.b32.cont [6/16] 0.0, 128
      %732 = vxpose.xlu0.b32.cont [7/16] 0.0, 128
      %733 = vxpose.xlu0.b32.cont [8/16] 0.0, 128
      %734 = vxpose.xlu0.b32.cont [9/16] 0.0, 128
      %735 = vxpose.xlu0.b32.cont [10/16] 0.0, 128
      %736 = vxpose.xlu0.b32.cont [11/16] 0.0, 128
      %737 = vxpose.xlu0.b32.cont [12/16] 0.0, 128
      %738 = vxpose.xlu0.b32.cont [13/16] 0.0, 128
      %739 = vxpose.xlu0.b32.cont [14/16] 0.0, 128
      %740 = vxpose.xlu0.b32.cont [15/16] 0.0, 128
      %741 = vxpose.xlu0.b32.end [16/16] 0.0, 128
      %v742 = vpop.trf.xlu0
      %v743 = vpop.trf.xlu0
      %v744 = vpop.trf.xlu0
      %v745 = vpop.trf.xlu0
      %v746 = vpop.trf.xlu0
      %v747 = vpop.trf.xlu0
      %v748 = vpop.trf.xlu0
      %v749 = vpop.trf.xlu0
      %v750 = vpop.trf.xlu0
      %v751 = vpop.trf.xlu0
      %v752 = vpop.trf.xlu0
      %v753 = vpop.trf.xlu0
      %v754 = vpop.trf.xlu0
      %v755 = vpop.trf.xlu0
      %v756 = vpop.trf.xlu0
      %v757 = vpop.trf.xlu0
      %v759 = vsel %vm576, %v710, 0
      %v762 = vsel %vm576, %v711, 0
      %v765 = vsel %vm576, %v712, 0
      %v768 = vsel %vm576, %v713, 0
      %v771 = vsel %vm576, %v714, 0
      %v774 = vsel %vm576, %v715, 0
      %v777 = vsel %vm576, %v716, 0
      %v780 = vsel %vm576, %v717, 0
      %v783 = vsel %vm576, %v718, 0
      %v786 = vsel %vm576, %v719, 0
      %v789 = vsel %vm576, %v720, 0
      %v792 = vsel %vm576, %v721, 0
      %v795 = vsel %vm576, %v722, 0
      %v798 = vsel %vm576, %v723, 0
      %v801 = vsel %vm576, %v724, 0
      %v804 = vsel %vm576, %v725, 0
      %v807 = vsel %vm576, %v742, 0
      %v810 = vsel %vm576, %v743, 0
      %v813 = vsel %vm576, %v744, 0
      %v816 = vsel %vm576, %v745, 0
      %v819 = vsel %vm576, %v746, 0
      %v822 = vsel %vm576, %v747, 0
      %v825 = vsel %vm576, %v748, 0
      %v828 = vsel %vm576, %v749, 0
      %v831 = vsel %vm576, %v750, 0
      %v834 = vsel %vm576, %v751, 0
      %v837 = vsel %vm576, %v752, 0
      %v840 = vsel %vm576, %v753, 0
      %v843 = vsel %vm576, %v754, 0
      %v846 = vsel %vm576, %v755, 0
      %v849 = vsel %vm576, %v756, 0
      %v852 = vsel %vm576, %v757, 0
      %v855 = vsel %vm576, %v686, 0
      %857 = vmatprep.subr.mxu0 0.0
      %858 = vmatpush1.xpose.msra.mxu0 %v855
      %859 = vmatprep.subr.mxu0 0.0
      %860 = vmatpush1.xpose.msra.mxu0 0.0
      %861 = vmatprep.subr.mxu0 0.0
      %862 = vmatpush1.xpose.msra.mxu0 0.0
      %863 = vmatprep.subr.mxu0 0.0
      %864 = vmatpush1.xpose.msra.mxu0 0.0
      %865 = vmatprep.subr.mxu0 0.0
      %866 = vmatpush1.xpose.msra.mxu0 0.0
      %867 = vmatprep.subr.mxu0 0.0
      %868 = vmatpush1.xpose.msra.mxu0 0.0
      %869 = vmatprep.subr.mxu0 0.0
      %870 = vmatpush1.xpose.msra.mxu0 0.0
      %871 = vmatprep.subr.mxu0 0.0
      %872 = vmatpush1.xpose.msra.mxu0 0.0
      %873 = vmatprep.subr.mxu0 0.0
      %874 = vmatpush1.xpose.msra.mxu0 0.0
      %875 = vmatprep.subr.mxu0 0.0
      %876 = vmatpush1.xpose.msra.mxu0 0.0
      %877 = vmatprep.subr.mxu0 0.0
      %878 = vmatpush1.xpose.msra.mxu0 0.0
      %879 = vmatprep.subr.mxu0 0.0
      %880 = vmatpush1.xpose.msra.mxu0 0.0
      %881 = vmatprep.subr.mxu0 0.0
      %882 = vmatpush1.xpose.msra.mxu0 0.0
      %883 = vmatprep.subr.mxu0 0.0
      %884 = vmatpush1.xpose.msra.mxu0 0.0
      %885 = vmatprep.subr.mxu0 0.0
      %886 = vmatpush1.xpose.msra.mxu0 0.0
      %887 = vmatprep.subr.mxu0 0.0
      %888 = vmatpush1.xpose.msra.mxu0 0.0
      %889 = vmatprep.subr.mxu0 0.0
      %890 = vmatpush1.xpose.msra.mxu0 0.0
      %891 = vmatprep.subr.mxu0 0.0
      %892 = vmatpush1.xpose.msra.mxu0 0.0
      %893 = vmatprep.subr.mxu0 0.0
      %894 = vmatpush1.xpose.msra.mxu0 0.0
      %895 = vmatprep.subr.mxu0 0.0
      %896 = vmatpush1.xpose.msra.mxu0 0.0
      %897 = vmatprep.subr.mxu0 0.0
      %898 = vmatpush1.xpose.msra.mxu0 0.0
      %899 = vmatprep.subr.mxu0 0.0
      %900 = vmatpush1.xpose.msra.mxu0 0.0
      %901 = vmatprep.subr.mxu0 0.0
      %902 = vmatpush1.xpose.msra.mxu0 0.0
      %903 = vmatprep.subr.mxu0 0.0
      %904 = vmatpush1.xpose.msra.mxu0 0.0
      %905 = vmatprep.subr.mxu0 0.0
      %906 = vmatpush1.xpose.msra.mxu0 0.0
      %907 = vmatprep.subr.mxu0 0.0
      %908 = vmatpush1.xpose.msra.mxu0 0.0
      %909 = vmatprep.subr.mxu0 0.0
      %910 = vmatpush1.xpose.msra.mxu0 0.0
      %911 = vmatprep.subr.mxu0 0.0
      %912 = vmatpush1.xpose.msra.mxu0 0.0
      %913 = vmatprep.subr.mxu0 0.0
      %914 = vmatpush1.xpose.msra.mxu0 0.0
      %915 = vmatprep.subr.mxu0 0.0
      %916 = vmatpush1.xpose.msra.mxu0 0.0
      %917 = vmatprep.subr.mxu0 0.0
      %918 = vmatpush1.xpose.msra.mxu0 0.0
      %919 = vmatprep.subr.mxu0 0.0
      %920 = vmatpush1.xpose.msra.mxu0 0.0
      %921 = vmatprep.mubr.f32.mxu0 0.0
      %922 = vmatmul.mubr.f32.gmra.mrb[0].mxu0 %v759
      %v923 = vpop.f32.mrb[0].mxu0
      %v924 = vadd.f32 %v692, %v923
      %v925 = vpop.f32.mrb[0].mxu0
      %926 = vmatprep.mubr.f32.mxu0 0.0
      %927 = vmatmul.mubr.f32.gmra.mrb[0].mxu0 %v762
      %v928 = vpop.f32.mrb[0].mxu0
      %v929 = vadd.f32 %v692, %v928
      %v930 = vpop.f32.mrb[0].mxu0
      %931 = vmatprep.mubr.f32.mxu0 0.0
      %932 = vmatmul.mubr.f32.gmra.mrb[0].mxu0 %v765
      %v933 = vpop.f32.mrb[0].mxu0
      %v934 = vadd.f32 %v692, %v933
      %v935 = vpop.f32.mrb[0].mxu0
      %936 = vmatprep.mubr.f32.mxu0 0.0
      %937 = vmatmul.mubr.f32.gmra.mrb[0].mxu0 %v768
      %v938 = vpop.f32.mrb[0].mxu0
      %v939 = vadd.f32 %v692, %v938
      %v940 = vpop.f32.mrb[0].mxu0
      %941 = vmatprep.mubr.f32.mxu0 0.0
      %942 = vmatmul.mubr.f32.gmra.mrb[0].mxu0 %v771
      %v943 = vpop.f32.mrb[0].mxu0
      %v944 = vadd.f32 %v692, %v943
      %v945 = vpop.f32.mrb[0].mxu0
      %946 = vmatprep.mubr.f32.mxu0 0.0
      %947 = vmatmul.mubr.f32.gmra.mrb[0].mxu0 %v774
      %v948 = vpop.f32.mrb[0].mxu0
      %v949 = vadd.f32 %v692, %v948
      %v950 = vpop.f32.mrb[0].mxu0
      %951 = vmatprep.mubr.f32.mxu0 0.0
      %952 = vmatmul.mubr.f32.gmra.mrb[0].mxu0 %v777
      %v953 = vpop.f32.mrb[0].mxu0
      %v954 = vadd.f32 %v692, %v953
      %v955 = vpop.f32.mrb[0].mxu0
      %956 = vmatprep.mubr.f32.mxu0 0.0
      %957 = vmatmul.mubr.f32.gmra.mrb[0].mxu0 %v780
      %v958 = vpop.f32.mrb[0].mxu0
      %v959 = vadd.f32 %v692, %v958
      %v960 = vpop.f32.mrb[0].mxu0
      %961 = vmatprep.mubr.f32.mxu0 0.0
      %962 = vmatmul.mubr.f32.gmra.mrb[0].mxu0 %v783
      %v963 = vpop.f32.mrb[0].mxu0
      %v964 = vadd.f32 %v692, %v963
      %v965 = vpop.f32.mrb[0].mxu0
      %966 = vmatprep.mubr.f32.mxu0 0.0
      %967 = vmatmul.mubr.f32.gmra.mrb[0].mxu0 %v786
      %v968 = vpop.f32.mrb[0].mxu0
      %v969 = vadd.f32 %v692, %v968
      %v970 = vpop.f32.mrb[0].mxu0
      %971 = vmatprep.mubr.f32.mxu0 0.0
      %972 = vmatmul.mubr.f32.gmra.mrb[0].mxu0 %v789
      %v973 = vpop.f32.mrb[0].mxu0
      %v974 = vadd.f32 %v692, %v973
      %v975 = vpop.f32.mrb[0].mxu0
      %976 = vmatprep.mubr.f32.mxu0 0.0
      %977 = vmatmul.mubr.f32.gmra.mrb[0].mxu0 %v792
      %v978 = vpop.f32.mrb[0].mxu0
      %v979 = vadd.f32 %v692, %v978
      %v980 = vpop.f32.mrb[0].mxu0
      %981 = vmatprep.mubr.f32.mxu0 0.0
      %982 = vmatmul.mubr.f32.gmra.mrb[0].mxu0 %v795
      %v983 = vpop.f32.mrb[0].mxu0
      %v984 = vadd.f32 %v692, %v983
      %v985 = vpop.f32.mrb[0].mxu0
      %986 = vmatprep.mubr.f32.mxu0 0.0
      %987 = vmatmul.mubr.f32.gmra.mrb[0].mxu0 %v798
      %v988 = vpop.f32.mrb[0].mxu0
      %v989 = vadd.f32 %v692, %v988
      %v990 = vpop.f32.mrb[0].mxu0
      %991 = vmatprep.mubr.f32.mxu0 0.0
      %992 = vmatmul.mubr.f32.gmra.mrb[0].mxu0 %v801
      %v993 = vpop.f32.mrb[0].mxu0
      %v994 = vadd.f32 %v692, %v993
      %v995 = vpop.f32.mrb[0].mxu0
      %996 = vmatprep.mubr.f32.mxu0 0.0
      %997 = vmatmul.mubr.f32.gmra.mrb[0].mxu0 %v804
      %v998 = vpop.f32.mrb[0].mxu0
      %v999 = vadd.f32 %v692, %v998
      %v1000 = vpop.f32.mrb[0].mxu0
      %1001 = vmatprep.mubr.f32.mxu0 0.0
      %1002 = vmatmul.mubr.f32.gmra.mrb[0].mxu0 %v807
      %v1003 = vpop.f32.mrb[0].mxu0
      %v1004 = vadd.f32 %v692, %v1003
      %v1005 = vpop.f32.mrb[0].mxu0
      %1006 = vmatprep.mubr.f32.mxu0 0.0
      %1007 = vmatmul.mubr.f32.gmra.mrb[0].mxu0 %v810
      %v1008 = vpop.f32.mrb[0].mxu0
      %v1009 = vadd.f32 %v692, %v1008
      %v1010 = vpop.f32.mrb[0].mxu0
      %1011 = vmatprep.mubr.f32.mxu0 0.0
      %1012 = vmatmul.mubr.f32.gmra.mrb[0].mxu0 %v813
      %v1013 = vpop.f32.mrb[0].mxu0
      %v1014 = vadd.f32 %v692, %v1013
      %v1015 = vpop.f32.mrb[0].mxu0
      %1016 = vmatprep.mubr.f32.mxu0 0.0
      %1017 = vmatmul.mubr.f32.gmra.mrb[0].mxu0 %v816
      %v1018 = vpop.f32.mrb[0].mxu0
      %v1019 = vadd.f32 %v692, %v1018
      %v1020 = vpop.f32.mrb[0].mxu0
      %1021 = vmatprep.mubr.f32.mxu0 0.0
      %1022 = vmatmul.mubr.f32.gmra.mrb[0].mxu0 %v819
      %v1023 = vpop.f32.mrb[0].mxu0
      %v1024 = vadd.f32 %v692, %v1023
      %v1025 = vpop.f32.mrb[0].mxu0
      %1026 = vmatprep.mubr.f32.mxu0 0.0
      %1027 = vmatmul.mubr.f32.gmra.mrb[0].mxu0 %v822
      %v1028 = vpop.f32.mrb[0].mxu0
      %v1029 = vadd.f32 %v692, %v1028
      %v1030 = vpop.f32.mrb[0].mxu0
      %1031 = vmatprep.mubr.f32.mxu0 0.0
      %1032 = vmatmul.mubr.f32.gmra.mrb[0].mxu0 %v825
      %v1033 = vpop.f32.mrb[0].mxu0
      %v1034 = vadd.f32 %v692, %v1033
      %v1035 = vpop.f32.mrb[0].mxu0
      %1036 = vmatprep.mubr.f32.mxu0 0.0
      %1037 = vmatmul.mubr.f32.gmra.mrb[0].mxu0 %v828
      %v1038 = vpop.f32.mrb[0].mxu0
      %v1039 = vadd.f32 %v692, %v1038
      %v1040 = vpop.f32.mrb[0].mxu0
      %1041 = vmatprep.mubr.f32.mxu0 0.0
      %1042 = vmatmul.mubr.f32.gmra.mrb[0].mxu0 %v831
      %v1043 = vpop.f32.mrb[0].mxu0
      %v1044 = vadd.f32 %v692, %v1043
      %v1045 = vpop.f32.mrb[0].mxu0
      %1046 = vmatprep.mubr.f32.mxu0 0.0
      %1047 = vmatmul.mubr.f32.gmra.mrb[0].mxu0 %v834
      %v1048 = vpop.f32.mrb[0].mxu0
      %v1049 = vadd.f32 %v692, %v1048
      %v1050 = vpop.f32.mrb[0].mxu0
      %1051 = vmatprep.mubr.f32.mxu0 0.0
      %1052 = vmatmul.mubr.f32.gmra.mrb[0].mxu0 %v837
      %v1053 = vpop.f32.mrb[0].mxu0
      %v1054 = vadd.f32 %v692, %v1053
      %v1055 = vpop.f32.mrb[0].mxu0
      %1056 = vmatprep.mubr.f32.mxu0 0.0
      %1057 = vmatmul.mubr.f32.gmra.mrb[0].mxu0 %v840
      %v1058 = vpop.f32.mrb[0].mxu0
      %v1059 = vadd.f32 %v692, %v1058
      %v1060 = vpop.f32.mrb[0].mxu0
      %1061 = vmatprep.mubr.f32.mxu0 0.0
      %1062 = vmatmul.mubr.f32.gmra.mrb[0].mxu0 %v843
      %v1063 = vpop.f32.mrb[0].mxu0
      %v1064 = vadd.f32 %v692, %v1063
      %v1065 = vpop.f32.mrb[0].mxu0
      %1066 = vmatprep.mubr.f32.mxu0 0.0
      %1067 = vmatmul.mubr.f32.gmra.mrb[0].mxu0 %v846
      %v1068 = vpop.f32.mrb[0].mxu0
      %v1069 = vadd.f32 %v692, %v1068
      %v1070 = vpop.f32.mrb[0].mxu0
      %1071 = vmatprep.mubr.f32.mxu0 0.0
      %1072 = vmatmul.mubr.f32.gmra.mrb[0].mxu0 %v849
      %v1073 = vpop.f32.mrb[0].mxu0
      %v1074 = vadd.f32 %v692, %v1073
      %v1075 = vpop.f32.mrb[0].mxu0
      %1076 = vmatprep.mubr.f32.mxu0 0.0
      %1077 = vmatmul.mubr.f32.gmra.mrb[0].mxu0 %v852
      %v1078 = vpop.f32.mrb[0].mxu0
      %v1079 = vadd.f32 %v692, %v1078
      %v1080 = vpop.f32.mrb[0].mxu0
      %1081 = vdwg.mxu0
      %vm1082 = vcmask 64512
      %1083 = vst.msk [vmem:[%s280] sm:$0xff] %vm1082, %v924
      %1084 = vst.msk [vmem:[%s280 + $0x8] sm:$0xff] %vm1082, %v929
      %1085 = vst.msk [vmem:[%s280 + $0x10] sm:$0xff] %vm1082, %v934
      %1086 = vst.msk [vmem:[%s280 + $0x18] sm:$0xff] %vm1082, %v939
      %1087 = vst.msk [vmem:[%s280 + $0x20] sm:$0xff] %vm1082, %v944
      %1088 = vst.msk [vmem:[%s280 + $0x28] sm:$0xff] %vm1082, %v949
      %1089 = vst.msk [vmem:[%s280 + $0x30] sm:$0xff] %vm1082, %v954
      %1090 = vst.msk [vmem:[%s280 + $0x38] sm:$0xff] %vm1082, %v959
      %1091 = vst.msk [vmem:[%s280 + $0x40] sm:$0xff] %vm1082, %v964
      %1092 = vst.msk [vmem:[%s280 + $0x48] sm:$0xff] %vm1082, %v969
      %1093 = vst.msk [vmem:[%s280 + $0x50] sm:$0xff] %vm1082, %v974
      %1094 = vst.msk [vmem:[%s280 + $0x58] sm:$0xff] %vm1082, %v979
      %1095 = vst.msk [vmem:[%s280 + $0x60] sm:$0xff] %vm1082, %v984
      %1096 = vst.msk [vmem:[%s280 + $0x68] sm:$0xff] %vm1082, %v989
      %1097 = vst.msk [vmem:[%s280 + $0x70] sm:$0xff] %vm1082, %v994
      %1098 = vst.msk [vmem:[%s280 + $0x78] sm:$0xff] %vm1082, %v999
      %1099 = vst.msk [vmem:[%s280 + $0x80] sm:$0xff] %vm1082, %v1004
      %1100 = vst.msk [vmem:[%s280 + $0x88] sm:$0xff] %vm1082, %v1009
      %1101 = vst.msk [vmem:[%s280 + $0x90] sm:$0xff] %vm1082, %v1014
      %1102 = vst.msk [vmem:[%s280 + $0x98] sm:$0xff] %vm1082, %v1019
      %1103 = vst.msk [vmem:[%s280 + $0xa0] sm:$0xff] %vm1082, %v1024
      %1104 = vst.msk [vmem:[%s280 + $0xa8] sm:$0xff] %vm1082, %v1029
      %1105 = vst.msk [vmem:[%s280 + $0xb0] sm:$0xff] %vm1082, %v1034
      %1106 = vst.msk [vmem:[%s280 + $0xb8] sm:$0xff] %vm1082, %v1039
      %1107 = vst.msk [vmem:[%s280 + $0xc0] sm:$0xff] %vm1082, %v1044
      %1108 = vst.msk [vmem:[%s280 + $0xc8] sm:$0xff] %vm1082, %v1049
      %1109 = vst.msk [vmem:[%s280 + $0xd0] sm:$0xff] %vm1082, %v1054
      %1110 = vst.msk [vmem:[%s280 + $0xd8] sm:$0xff] %vm1082, %v1059
      %1111 = vst.msk [vmem:[%s280 + $0xe0] sm:$0xff] %vm1082, %v1064
      %1112 = vst.msk [vmem:[%s280 + $0xe8] sm:$0xff] %vm1082, %v1069
      %1113 = vst.msk [vmem:[%s280 + $0xf0] sm:$0xff] %vm1082, %v1074
      %1114 = vst.msk [vmem:[%s280 + $0xf8] sm:$0xff] %vm1082, %v1079
      %s1115 = smul.u32 32, %s18
      %p1116 = scmp.lt.s32.totalorder %s1115, 63
      %s1117 = scalar_select %p1116, %s1115, 63
      %s1118 = smul.addr %s1117, 8
      %s1119 = scalar_lea.vmem %s7, %s1118
      // Predicated region
      $region49: #{simple_model_forward.1} parent=47 // pred_check
        %p1120 = pneg %p188
      $region50: #{simple_model_forward.1} parent=47 // pred_check_branch
        %1122 = sbr.rel (%p1120) target = $region52
      $region51: #{simple_model_forward.1} parent=47 // pred_region
        %s1123 = smul.u32 32, %s18
      $region52: #{simple_model_forward.1} parent=47 // pred_fallthru
        _
    $region48: #{simple_model_forward.1} parent=5 // pred_fallthru
      _
    %p1124 = scmp.le.s32.totalorder 2, %s13
    // Predicated region
    $region53: #{simple_model_forward.1} parent=5 // pred_check
      %p1125 = pneg %p1124
    $region54: #{simple_model_forward.1} parent=5 // pred_check_branch
      %1127 = sbr.rel (%p1125) target = $region56
    $region55: #{simple_model_forward.1} parent=5 // pred_region
      %s1128 = ssub.s32 %s13, 2
      // Predicated region
      $region57: #{simple_model_forward.1} parent=55 // pred_check
        %p1129 = pneg %p194
      $region58: #{simple_model_forward.1} parent=55 // pred_check_branch
        %1131 = sbr.rel (%p1129) target = $region60
      $region59: #{simple_model_forward.1} parent=55 // pred_region
        %s1132 = smul.u32 32, %s19
        %p1133 = scmp.lt.s32.totalorder %s1132, 63
        %s1134 = scalar_select %p1133, %s1132, 63
        %s1135 = smul.addr %s1134, 8
        %s1136 = scalar_lea.vmem %s7, %s1135
      $region60: #{simple_model_forward.1} parent=55 // pred_fallthru
        _
    $region56: #{simple_model_forward.1} parent=5 // pred_fallthru
      _
  $region6: #{simple_model_forward.1} parent=0 // loop_footer
    %s17 = sadd.s32 1, %s13
  $region7: #{simple_model_forward.1} parent=0 // loop_footer_branch
    %12 = sbr.rel target = $region3
  $region8: #{simple_model_forward.1} parent=0 // loop_exit
    _

</llo_original>
